<compile_context>
chip_gen: v6e
topology: v6e:2x2x1
jax: 0.10.0
libtpu: 0.0.40
codegen_flags: <defaults>
</compile_context>

<pallas_src>
import functools

import jax
import jax.numpy as jnp
from jax import lax
from jax.experimental import pallas as pl
from jax.experimental.pallas import tpu as pltpu


def _dwconv_kernel(x_ref, w_ref, b_ref, o_ref, acc_ref, *, K, C, H, W, OH, OW, padding):
    """Depthwise conv for one image in lane-flattened layout.

    x_ref  : (1, H, W*C)      input tile (VMEM), channels innermost on lanes
    w_ref  : (K*K, OW*C)      lane-tiled, edge-masked per-tap weights
    b_ref  : (1, OW*C)        lane-tiled bias
    o_ref  : (1, OH, OW*C)    output tile
    acc_ref: (OH, OW*C) f32   VMEM scratch accumulator
    """
    WC = W * C
    OWC = OW * C

    # Hoisted: bias-initialize the f32 accumulator once; load all tap weights once.
    acc_ref[...] = jnp.broadcast_to(b_ref[...].astype(jnp.float32), (OH, OWC))
    w = w_ref[...].astype(jnp.float32)                       # (K*K, OW*C)

    for kh in range(K):                                      # static K*K unroll
        dh = kh - padding
        lo = max(0, -dh)                                     # first valid output row
        hi = min(OH, H - dh)                                 # one past last valid output row
        if hi <= lo:
            continue
        n = hi - lo
        # Vertical tap: slice only the needed rows straight from the ref (no full-image
        # materialization, no wrapper-side padding); cast the patch once to f32.
        rows = x_ref[0, pl.ds(lo + dh, n), :].astype(jnp.float32)    # (n, W*C)

        part = None
        for kw in range(K):
            dw = kw - padding
            shift = (-dw * C) % WC
            # Horizontal tap: lane roll (XLU slot).  Wrapped lanes at the image edge
            # are multiplied by zeroed weight lanes, so no extra mask/select needed.
            tap = pltpu.roll(rows, shift=shift, axis=1) if shift else rows
            if OWC != WC:
                tap = tap[:, :OWC]
            w_tap = w[kh * K + kw: kh * K + kw + 1, :]        # (1, OW*C)
            contrib = tap * w_tap
            part = contrib if part is None else part + contrib

        acc_ref[pl.ds(lo, n), :] = acc_ref[pl.ds(lo, n), :] + part

    o_ref[0] = acc_ref[...].astype(o_ref.dtype)


def dwconv2d(x_bhwc, weight_kkc, bias_c, *, stride=1, padding=1):
    """Depthwise 2-D conv, NHWC in / NHWC out (matches DWConv2d.forward).

    x_bhwc     : (B, H, W, C)
    weight_kkc : (K, K, C)   (PyTorch depthwise weight (C,1,K,K) transposed channel-last)
    bias_c     : (C,)
    """
    B, H, W, C = x_bhwc.shape
    K = weight_kkc.shape[0]
    if stride != 1:
        # TODO(synk): stride > 1 (unused by MaSA's DWConv2d(dim, 3, 1, 1)) is not
        # implemented in the lane-flattened fast path.
        raise NotImplementedError("dwconv2d Pallas kernel supports stride == 1 only")
    OH = H + 2 * padding - K + 1
    OW = W + 2 * padding - K + 1
    if OW > W or OH > H:
        # TODO(synk): padding > (K-1)//2 would need extra lane padding; unused here.
        raise NotImplementedError("padding must satisfy 2*padding <= K-1")

    WC, OWC = W * C, OW * C

    # Free contiguous relayout: channels stay innermost; lanes carry W*C.
    x_flat = x_bhwc.reshape(B, H, WC)

    # Lane-tiled weights with the horizontal halo folded in as zeros (per-tap masks on
    # output columns whose source column falls outside [0, W)).
    ow = jnp.arange(OW)
    dws = jnp.arange(K) - padding
    valid = ((ow[None, :] + dws[:, None]) >= 0) & ((ow[None, :] + dws[:, None]) < W)  # (K, OW)
    w_tiled = jnp.broadcast_to(weight_kkc[:, :, None, :], (K, K, OW, C))
    w_flat = (w_tiled * valid[None, :, :, None].astype(weight_kkc.dtype)).reshape(K * K, OWC)
    b_flat = jnp.tile(bias_c, OW).reshape(1, OWC)

    kernel = functools.partial(
        _dwconv_kernel, K=K, C=C, H=H, W=W, OH=OH, OW=OW, padding=padding)

    itemsize = jnp.dtype(x_bhwc.dtype).itemsize
    est = (2 * H * WC * itemsize          # input block, double-buffered
           + 2 * OH * OWC * itemsize      # output block, double-buffered
           + OH * OWC * 4                 # f32 scratch accumulator
           + 2 * (K * K + 1) * OWC * 4)   # weights + bias blocks
    vmem_limit = int(max(2 * est + (4 << 20), 16 << 20))

    out_flat = pl.pallas_call(
        kernel,
        out_shape=jax.ShapeDtypeStruct((B, OH, OWC), x_bhwc.dtype),
        grid_spec=pltpu.PrefetchScalarGridSpec(
            num_scalar_prefetch=0,
            grid=(B,),
            in_specs=[
                pl.BlockSpec((1, H, WC), lambda b: (b, 0, 0)),
                pl.BlockSpec((K * K, OWC), lambda b: (0, 0)),
                pl.BlockSpec((1, OWC), lambda b: (0, 0)),
            ],
            out_specs=pl.BlockSpec((1, OH, OWC), lambda b: (b, 0, 0)),
            scratch_shapes=[pltpu.VMEM((OH, OWC), jnp.float32)],
        ),
        compiler_params=pltpu.CompilerParams(
            dimension_semantics=("parallel",),
            vmem_limit_bytes=vmem_limit,
        ),
    )(x_flat, w_flat, b_flat)

    return out_flat.reshape(B, OH, OW, C)


def _reference(x_bhwc, weight_kkc, bias_c, *, stride=1, padding=1):
    """Pure-JAX reference: grouped conv identical to nn.Conv2d(groups=dim)."""
    C = x_bhwc.shape[-1]
    K = weight_kkc.shape[0]
    w = jnp.transpose(weight_kkc, (2, 0, 1)).reshape(C, 1, K, K)   # (O=C, I=1, K, K)
    w_hwio = jnp.transpose(w, (2, 3, 1, 0))                        # (K, K, 1, C)
    y = lax.conv_general_dilated(
        x_bhwc, w_hwio,
        window_strides=(stride, stride),
        padding=((padding, padding), (padding, padding)),
        dimension_numbers=("NHWC", "HWIO", "NHWC"),
        feature_group_count=C,
    )
    return y + bias_c.reshape(1, 1, 1, C)


if __name__ == "__main__":
    # DWConv2d(dim=C, kernel_size=3, stride=1, padding=1), input (b, h, w, c)
    B, H, W, C = 2, 16, 16, 8
    K, STRIDE, PAD = 3, 1, 1

    key = jax.random.PRNGKey(0)
    kx, kw, kb = jax.random.split(key, 3)

    x = jax.random.normal(kx, (B, H, W, C), dtype=jnp.float32)
    # PyTorch depthwise weight is (dim, 1, K, K); stored channel-last as (K, K, dim).
    weight = jax.random.normal(kw, (K, K, C), dtype=jnp.float32) * 0.1
    bias = jax.random.normal(kb, (C,), dtype=jnp.float32) * 0.1

    out = dwconv2d(x, weight, bias, stride=STRIDE, padding=PAD)
    out = jax.block_until_ready(out)

    ref = _reference(x, weight, bias, stride=STRIDE, padding=PAD)
    assert out.shape == (B, H, W, C), out.shape
    assert jnp.allclose(out, ref, atol=1e-5, rtol=1e-5), float(jnp.abs(out - ref).max())

    print("KERNEL_OK")
</pallas_src>

<mosaic_0001>
module attributes {stable_mosaic.version = 11 : i64} {
  func.func @_dwconv_kernel(%arg0: i32, %arg1: memref<1x16x128xf32, #tpu.memory_space<vmem>>, %arg2: memref<9x128xf32, #tpu.memory_space<vmem>>, %arg3: memref<1x128xf32, #tpu.memory_space<vmem>>, %arg4: memref<1x16x128xf32, #tpu.memory_space<vmem>>, %arg5: memref<16x128xf32, #tpu.memory_space<vmem>>) attributes {dimension_semantics = [#tpu.dimension_semantics<parallel>], iteration_bounds = array<i64: 2>, scalar_prefetch = 0 : i64, scratch_operands = 1 : i64, tpu.core_type = #tpu.core_type<tc>, window_params = [{transform_indices = @transform_0, window_bounds = array<i64: 1, 16, 128>}, {pipeline_mode = #tpu.pipeline_mode<synchronous>, transform_indices = @transform_1, window_bounds = array<i64: 9, 128>}, {pipeline_mode = #tpu.pipeline_mode<synchronous>, transform_indices = @transform_2, window_bounds = array<i64: 1, 128>}, {transform_indices = @transform_3, window_bounds = array<i64: 1, 16, 128>}]} {
    %c0 = arith.constant 0 : index
    %c0_0 = arith.constant 0 : index
    %0 = vector.load %arg3[%c0, %c0_0] : memref<1x128xf32, #tpu.memory_space<vmem>>, vector<1x128xf32>
    %1 = vector.shape_cast %0 : vector<1x128xf32> to vector<1x128xf32>
    %2 = vector.broadcast %1 : vector<1x128xf32> to vector<16x128xf32>
    %c0_1 = arith.constant 0 : index
    %c0_2 = arith.constant 0 : index
    %3 = vector.load %arg5[%c0_1, %c0_2] : memref<16x128xf32, #tpu.memory_space<vmem>>, vector<16x128xf32>
    tpu.vector_store %arg5[%c0_1, %c0_2], %2 {strides = array<i32>} : memref<16x128xf32, #tpu.memory_space<vmem>>, vector<16x128xf32>,
    %c0_3 = arith.constant 0 : index
    %c0_4 = arith.constant 0 : index
    %4 = vector.load %arg2[%c0_3, %c0_4] : memref<9x128xf32, #tpu.memory_space<vmem>>, vector<9x128xf32>
    %c0_5 = arith.constant 0 : index
    %c0_6 = arith.constant 0 : index
    %c0_7 = arith.constant 0 : index
    %5 = vector.load %arg1[%c0_5, %c0_6, %c0_7] : memref<1x16x128xf32, #tpu.memory_space<vmem>>, vector<1x15x128xf32>
    %6 = vector.shape_cast %5 : vector<1x15x128xf32> to vector<15x128xf32>
    %c8_i32 = arith.constant 8 : i32
    %7 = tpu.dynamic_rotate %6 by %c8_i32 dim 1 : vector<15x128xf32>, i32 -> vector<15x128xf32>
    %8 = vector.extract_strided_slice %4 {offsets = [0, 0], sizes = [1, 128], strides = [1, 1]} : vector<9x128xf32> to vector<1x128xf32>
    %9 = vector.broadcast %8 : vector<1x128xf32> to vector<15x128xf32>
    %10 = arith.mulf %7, %9 : vector<15x128xf32>
    %11 = vector.extract_strided_slice %4 {offsets = [1, 0], sizes = [1, 128], strides = [1, 1]} : vector<9x128xf32> to vector<1x128xf32>
    %12 = vector.broadcast %11 : vector<1x128xf32> to vector<15x128xf32>
    %13 = arith.mulf %6, %12 : vector<15x128xf32>
    %14 = arith.addf %10, %13 : vector<15x128xf32>
    %c120_i32 = arith.constant 120 : i32
    %15 = tpu.dynamic_rotate %6 by %c120_i32 dim 1 : vector<15x128xf32>, i32 -> vector<15x128xf32>
    %16 = vector.extract_strided_slice %4 {offsets = [2, 0], sizes = [1, 128], strides = [1, 1]} : vector<9x128xf32> to vector<1x128xf32>
    %17 = vector.broadcast %16 : vector<1x128xf32> to vector<15x128xf32>
    %18 = arith.mulf %15, %17 : vector<15x128xf32>
    %19 = arith.addf %14, %18 : vector<15x128xf32>
    %c1 = arith.constant 1 : index
    %c0_8 = arith.constant 0 : index
    %20 = vector.load %arg5[%c1, %c0_8] : memref<16x128xf32, #tpu.memory_space<vmem>>, vector<15x128xf32>
    %21 = arith.addf %20, %19 : vector<15x128xf32>
    %c1_9 = arith.constant 1 : index
    %c0_10 = arith.constant 0 : index
    %22 = vector.load %arg5[%c1_9, %c0_10] : memref<16x128xf32, #tpu.memory_space<vmem>>, vector<15x128xf32>
    tpu.vector_store %arg5[%c1_9, %c0_10], %21 {strides = array<i32>} : memref<16x128xf32, #tpu.memory_space<vmem>>, vector<15x128xf32>,
    %c0_11 = arith.constant 0 : index
    %c0_12 = arith.constant 0 : index
    %c0_13 = arith.constant 0 : index
    %23 = vector.load %arg1[%c0_11, %c0_12, %c0_13] : memref<1x16x128xf32, #tpu.memory_space<vmem>>, vector<1x16x128xf32>
    %24 = vector.shape_cast %23 : vector<1x16x128xf32> to vector<16x128xf32>
    %c8_i32_14 = arith.constant 8 : i32
    %25 = tpu.dynamic_rotate %24 by %c8_i32_14 dim 1 : vector<16x128xf32>, i32 -> vector<16x128xf32>
    %26 = vector.extract_strided_slice %4 {offsets = [3, 0], sizes = [1, 128], strides = [1, 1]} : vector<9x128xf32> to vector<1x128xf32>
    %27 = vector.broadcast %26 : vector<1x128xf32> to vector<16x128xf32>
    %28 = arith.mulf %25, %27 : vector<16x128xf32>
    %29 = vector.extract_strided_slice %4 {offsets = [4, 0], sizes = [1, 128], strides = [1, 1]} : vector<9x128xf32> to vector<1x128xf32>
    %30 = vector.broadcast %29 : vector<1x128xf32> to vector<16x128xf32>
    %31 = arith.mulf %24, %30 : vector<16x128xf32>
    %32 = arith.addf %28, %31 : vector<16x128xf32>
    %c120_i32_15 = arith.constant 120 : i32
    %33 = tpu.dynamic_rotate %24 by %c120_i32_15 dim 1 : vector<16x128xf32>, i32 -> vector<16x128xf32>
    %34 = vector.extract_strided_slice %4 {offsets = [5, 0], sizes = [1, 128], strides = [1, 1]} : vector<9x128xf32> to vector<1x128xf32>
    %35 = vector.broadcast %34 : vector<1x128xf32> to vector<16x128xf32>
    %36 = arith.mulf %33, %35 : vector<16x128xf32>
    %37 = arith.addf %32, %36 : vector<16x128xf32>
    %c0_16 = arith.constant 0 : index
    %c0_17 = arith.constant 0 : index
    %38 = vector.load %arg5[%c0_16, %c0_17] : memref<16x128xf32, #tpu.memory_space<vmem>>, vector<16x128xf32>
    %39 = arith.addf %38, %37 : vector<16x128xf32>
    %c0_18 = arith.constant 0 : index
    %c0_19 = arith.constant 0 : index
    %40 = vector.load %arg5[%c0_18, %c0_19] : memref<16x128xf32, #tpu.memory_space<vmem>>, vector<16x128xf32>
    tpu.vector_store %arg5[%c0_18, %c0_19], %39 {strides = array<i32>} : memref<16x128xf32, #tpu.memory_space<vmem>>, vector<16x128xf32>,
    %c0_20 = arith.constant 0 : index
    %c1_21 = arith.constant 1 : index
    %c0_22 = arith.constant 0 : index
    %41 = vector.load %arg1[%c0_20, %c1_21, %c0_22] : memref<1x16x128xf32, #tpu.memory_space<vmem>>, vector<1x15x128xf32>
    %42 = vector.shape_cast %41 : vector<1x15x128xf32> to vector<15x128xf32>
    %c8_i32_23 = arith.constant 8 : i32
    %43 = tpu.dynamic_rotate %42 by %c8_i32_23 dim 1 : vector<15x128xf32>, i32 -> vector<15x128xf32>
    %44 = vector.extract_strided_slice %4 {offsets = [6, 0], sizes = [1, 128], strides = [1, 1]} : vector<9x128xf32> to vector<1x128xf32>
    %45 = vector.broadcast %44 : vector<1x128xf32> to vector<15x128xf32>
    %46 = arith.mulf %43, %45 : vector<15x128xf32>
    %47 = vector.extract_strided_slice %4 {offsets = [7, 0], sizes = [1, 128], strides = [1, 1]} : vector<9x128xf32> to vector<1x128xf32>
    %48 = vector.broadcast %47 : vector<1x128xf32> to vector<15x128xf32>
    %49 = arith.mulf %42, %48 : vector<15x128xf32>
    %50 = arith.addf %46, %49 : vector<15x128xf32>
    %c120_i32_24 = arith.constant 120 : i32
    %51 = tpu.dynamic_rotate %42 by %c120_i32_24 dim 1 : vector<15x128xf32>, i32 -> vector<15x128xf32>
    %52 = vector.extract_strided_slice %4 {offsets = [8, 0], sizes = [1, 128], strides = [1, 1]} : vector<9x128xf32> to vector<1x128xf32>
    %53 = vector.broadcast %52 : vector<1x128xf32> to vector<15x128xf32>
    %54 = arith.mulf %51, %53 : vector<15x128xf32>
    %55 = arith.addf %50, %54 : vector<15x128xf32>
    %c0_25 = arith.constant 0 : index
    %c0_26 = arith.constant 0 : index
    %56 = vector.load %arg5[%c0_25, %c0_26] : memref<16x128xf32, #tpu.memory_space<vmem>>, vector<15x128xf32>
    %57 = arith.addf %56, %55 : vector<15x128xf32>
    %c0_27 = arith.constant 0 : index
    %c0_28 = arith.constant 0 : index
    %58 = vector.load %arg5[%c0_27, %c0_28] : memref<16x128xf32, #tpu.memory_space<vmem>>, vector<15x128xf32>
    tpu.vector_store %arg5[%c0_27, %c0_28], %57 {strides = array<i32>} : memref<16x128xf32, #tpu.memory_space<vmem>>, vector<15x128xf32>,
    %c0_29 = arith.constant 0 : index
    %c0_30 = arith.constant 0 : index
    %59 = vector.load %arg5[%c0_29, %c0_30] : memref<16x128xf32, #tpu.memory_space<vmem>>, vector<16x128xf32>
    %c0_31 = arith.constant 0 : index
    %c0_32 = arith.constant 0 : index
    %c0_33 = arith.constant 0 : index
    %60 = vector.load %arg4[%c0_31, %c0_32, %c0_33] : memref<1x16x128xf32, #tpu.memory_space<vmem>>, vector<1x16x128xf32>
    %61 = vector.shape_cast %60 : vector<1x16x128xf32> to vector<16x128xf32>
    %62 = vector.shape_cast %59 : vector<16x128xf32> to vector<1x16x128xf32>
    tpu.vector_store %arg4[%c0_31, %c0_32, %c0_33], %62 {strides = array<i32>} : memref<1x16x128xf32, #tpu.memory_space<vmem>>, vector<1x16x128xf32>,
    return
  }
  func.func @transform_0(%arg0: i32) -> (i32, i32, i32) {
    %c0_i32 = arith.constant 0 : i32
    %c0_i32_0 = arith.constant 0 : i32
    %c0_i32_1 = arith.constant 0 : i32
    return %arg0, %c0_i32, %c0_i32_0 : i32, i32, i32
  }
  func.func @transform_1(%arg0: i32) -> (i32, i32) {
    %c0_i32 = arith.constant 0 : i32
    %c0_i32_0 = arith.constant 0 : i32
    %c0_i32_1 = arith.constant 0 : i32
    return %c0_i32, %c0_i32_0 : i32, i32
  }
  func.func @transform_2(%arg0: i32) -> (i32, i32) {
    %c0_i32 = arith.constant 0 : i32
    %c0_i32_0 = arith.constant 0 : i32
    %c0_i32_1 = arith.constant 0 : i32
    return %c0_i32, %c0_i32_0 : i32, i32
  }
  func.func @transform_3(%arg0: i32) -> (i32, i32, i32) {
    %c0_i32 = arith.constant 0 : i32
    %c0_i32_0 = arith.constant 0 : i32
    %c0_i32_1 = arith.constant 0 : i32
    return %arg0, %c0_i32, %c0_i32_0 : i32, i32, i32
  }
}

</mosaic_0001>

<llo_original>
// kernel: tpu_custom_call.1
$region0: #{tpu_custom_call.1}
  #allocation0 [shape = 'u32[]', space=smem, size = 0x4, offset = 0x4, fixed_abs, tag = 'smem constant byte address 0x4 - core index']
  #allocation1 [shape = 'u32[144,128]{1,0:T(1,128)}', space=vmem, size = 0x12000, scoped, tag = 'internal scratch']
  #allocation2 [shape = 'f32[16,128]{1,0:T(8,128)}', space=vmem, size = 0x2000, scoped, tag = 'scratch operand']
  %s0 = inlined_call_operand.hbm [shape: f32[2,16,128], index: 0, kind: input, shape index: {}]
  %s1 = inlined_call_operand.hbm [shape: f32[9,128], index: 1, kind: input, shape index: {}]
  %s2 = inlined_call_operand.vmem [shape: f32[1,128], index: 2, kind: input, shape index: {}]
  %s3 = inlined_call_operand.hbm [shape: f32[2,16,128], index: 3, kind: output, shape index: {}]
  %s4 = sld [smem:[#allocation0]]
  $region53: #{tpu_custom_call.1} parent=0
    _
  %s6 = ssub.s32 1, %s4
  %s7 = scalar_select 0, %s6, %s4
  $region1: #{tpu_custom_call.1} parent=0
    #allocation3 [shape = 'u8[16384]{0}', space=vmem, size = 0x4000, scoped, tag = 'input window, operand 0']
    #allocation4 [shape = 's32[2]{0}', space=sflag, size = 0x8, scoped, tag = 'scoped memory for tpu_custom_call.1']
    #allocation5 [shape = 's32[2]{0}', space=sflag, size = 0x8, scoped, tag = 'scoped memory for tpu_custom_call.1']
    #allocation6 [shape = 'u8[8192]{0}', space=vmem, size = 0x2000, scoped, tag = 'input window, operand 1, single buffered']
    #allocation7 [shape = 's32[1]{0}', space=sflag, size = 0x4, scoped, tag = 'scoped memory for tpu_custom_call.1']
    #allocation8 [shape = 'u8[16384]{0}', space=vmem, size = 0x4000, scoped, tag = 'output window, operand 0']
    %8 = vsyncpa [#allocation4], 0
    %s9 = scalar_lea.sflag [#allocation4], 1
    %10 = vsyncpa %s9, 0
    %11 = vsyncpa [#allocation7], 0
    %12 = vsyncpa [#allocation5], 0
    %s13 = scalar_lea.sflag [#allocation5], 1
    %14 = vsyncpa %s13, 0
    loop: start=0, step=1, limit=4
    $region2: #{tpu_custom_call.1} parent=1 // loop_pre_header
      _
    $region3: #{tpu_custom_call.1} parent=1 // loop_header
      %s16 = sphi 0, %s20
      %p17 = scmp.ge.s32.totalorder %s16, 4
      %s26 = sphi 0, %s28
      %s29 = sphi 0, %s26
      %s30 = sphi 0, %s29
      %s46 = sphi 0, %s30
      %s50 = sphi 0, %s50
      %s52 = sphi 0, %s50
      %s53 = sphi 0, %s52
      %s67 = sphi 0, %s53
      %s71 = sphi 0, %s71
      %s73 = sphi 0, %s71
      %s74 = sphi 0, %s73
      %s88 = sphi 0, %s74
      %s94 = sphi 0, %s96
      %s97 = sphi 0, %s94
      %s98 = sphi 0, %s97
      %s114 = sphi 0, %s98
    $region4: #{tpu_custom_call.1} parent=1 // loop_header_branch
      %19 = sbr.rel (%p17) target = $region8
    $region5: #{tpu_custom_call.1} parent=1 // loop_body
      %s21 = ssub.s32 %s16, 1
      %s22 = ssub.s32 %s16, 2
      %s23 = sadd.s32 %s16, 1
      %s24 = ssub.s32 %s16, %s23
      %p25 = scmp.eq.s32.totalorder %s24, 0
      %s27 = sadd.s32 %s26, 1
      %s28 = scalar_select %p25, %s26, %s27
      %p31 = pneg %p25
      %p32 = scmp.eq.s32.totalorder %s16, 1
      %p33 = por %p31, %p32
      %p34 = scmp.ne.s32.totalorder %s26, %s29
      %p35 = scmp.eq.s32.totalorder %s16, 0
      %p36 = por %p34, %p35
      %p37 = scmp.ne.s32.totalorder %s26, %s29
      %p38 = scmp.eq.s32.totalorder %s21, 1
      %p39 = por %p37, %p38
      %p40 = scmp.ne.s32.totalorder %s29, %s30
      %p41 = scmp.eq.s32.totalorder %s21, 0
      %p42 = por %p40, %p41
      %p43 = scmp.ne.s32.totalorder %s29, %s30
      %p44 = scmp.eq.s32.totalorder %s22, 1
      %p45 = por %p43, %p44
      %p47 = scmp.ne.s32.totalorder %s30, %s46
      %p48 = scmp.eq.s32.totalorder %s22, 0
      %p49 = por %p47, %p48
      %s51 = sadd.s32 %s50, 1
      %p54 = scmp.eq.s32.totalorder %s16, 1
      %p55 = scmp.ne.s32.totalorder %s50, %s52
      %p56 = scmp.eq.s32.totalorder %s16, 0
      %p57 = por %p55, %p56
      %p58 = scmp.ne.s32.totalorder %s50, %s52
      %p59 = scmp.eq.s32.totalorder %s21, 1
      %p60 = por %p58, %p59
      %p61 = scmp.ne.s32.totalorder %s52, %s53
      %p62 = scmp.eq.s32.totalorder %s21, 0
      %p63 = por %p61, %p62
      %p64 = scmp.ne.s32.totalorder %s52, %s53
      %p65 = scmp.eq.s32.totalorder %s22, 1
      %p66 = por %p64, %p65
      %p68 = scmp.ne.s32.totalorder %s53, %s67
      %p69 = scmp.eq.s32.totalorder %s22, 0
      %p70 = por %p68, %p69
      %s72 = sadd.s32 %s71, 1
      %p75 = scmp.eq.s32.totalorder %s16, 1
      %p76 = scmp.ne.s32.totalorder %s71, %s73
      %p77 = scmp.eq.s32.totalorder %s16, 0
      %p78 = por %p76, %p77
      %p79 = scmp.ne.s32.totalorder %s71, %s73
      %p80 = scmp.eq.s32.totalorder %s21, 1
      %p81 = por %p79, %p80
      %p82 = scmp.ne.s32.totalorder %s73, %s74
      %p83 = scmp.eq.s32.totalorder %s21, 0
      %p84 = por %p82, %p83
      %p85 = scmp.ne.s32.totalorder %s73, %s74
      %p86 = scmp.eq.s32.totalorder %s22, 1
      %p87 = por %p85, %p86
      %p89 = scmp.ne.s32.totalorder %s74, %s88
      %p90 = scmp.eq.s32.totalorder %s22, 0
      %p91 = por %p89, %p90
      %s92 = ssub.s32 %s16, %s23
      %p93 = scmp.eq.s32.totalorder %s92, 0
      %s95 = sadd.s32 %s94, 1
      %s96 = scalar_select %p93, %s94, %s95
      %p99 = pneg %p93
      %p100 = scmp.eq.s32.totalorder %s16, 1
      %p101 = por %p99, %p100
      %p102 = scmp.ne.s32.totalorder %s94, %s97
      %p103 = scmp.eq.s32.totalorder %s16, 0
      %p104 = por %p102, %p103
      %p105 = scmp.ne.s32.totalorder %s94, %s97
      %p106 = scmp.eq.s32.totalorder %s21, 1
      %p107 = por %p105, %p106
      %p108 = scmp.ne.s32.totalorder %s97, %s98
      %p109 = scmp.eq.s32.totalorder %s21, 0
      %p110 = por %p108, %p109
      %p111 = scmp.ne.s32.totalorder %s97, %s98
      %p112 = scmp.eq.s32.totalorder %s22, 1
      %p113 = por %p111, %p112
      %p115 = scmp.ne.s32.totalorder %s98, %s114
      %p116 = scmp.eq.s32.totalorder %s22, 0
      %p117 = por %p115, %p116
      %p118 = scmp.le.s32.totalorder 1, %s16
      %p119 = scmp.lt.s32.totalorder %s16, 3
      %p120 = pnand %p118, %p119
      %p121 = pneg %p120
      // Predicated region
      $region9: #{tpu_custom_call.1} parent=5 // pred_check
        _
      $region10: #{tpu_custom_call.1} parent=5 // pred_check_branch
        %123 = sbr.rel (%p120) target = $region12
      $region11: #{tpu_custom_call.1} parent=5 // pred_region
        %s124 = ssub.s32 %s16, 1
        // Predicated region
        $region13: #{tpu_custom_call.1} parent=11 // pred_check
          %p125 = pneg %p63
        $region14: #{tpu_custom_call.1} parent=11 // pred_check_branch
          %127 = sbr.rel (%p125) target = $region16
        $region15: #{tpu_custom_call.1} parent=11 // pred_region
          %s129 = ssub.s32 256, 256
          %130 = vsyncadd [#allocation7], %s129
          %s131 = sshll.u32 [#allocation6], 4
          %s132 = int_to_ptr.vmem [resolvable:$true] %s131
          %137 = dma.hbm_to_vmem [thread:$0]  %s1, 256, %s132, [#allocation7], 128, 128, 8
        $region16: #{tpu_custom_call.1} parent=11 // pred_fallthru
          _
        // Predicated region
        $region17: #{tpu_custom_call.1} parent=11 // pred_check
          %p138 = pneg %p84
        $region18: #{tpu_custom_call.1} parent=11 // pred_check_branch
          %140 = sbr.rel (%p138) target = $region20
        $region19: #{tpu_custom_call.1} parent=11 // pred_region
          _
        $region20: #{tpu_custom_call.1} parent=11 // pred_fallthru
          _
      $region12: #{tpu_custom_call.1} parent=5 // pred_fallthru
        _
      %p141 = scmp.lt.s32.totalorder %s16, 2
      // Predicated region
      $region21: #{tpu_custom_call.1} parent=5 // pred_check
        %p142 = pneg %p141
      $region22: #{tpu_custom_call.1} parent=5 // pred_check_branch
        %144 = sbr.rel (%p142) target = $region24
      $region23: #{tpu_custom_call.1} parent=5 // pred_region
        // Predicated region
        $region25: #{tpu_custom_call.1} parent=23 // pred_check
          %p145 = pneg %p36
        $region26: #{tpu_custom_call.1} parent=23 // pred_check_branch
          %147 = sbr.rel (%p145) target = $region28
        $region27: #{tpu_custom_call.1} parent=23 // pred_region
          %s148 = sand.u32 %s26, 1
          %s149 = scalar_lea.sflag [#allocation4], %s148
          %s150 = sand.u32 %s26, 1
          %s151 = smul.addr %s150, 16
          %s152 = scalar_lea.vmem [#allocation3], %s151
          %s154 = ssub.s32 256, 256
          %155 = vsyncadd %s149, %s154
          %s156 = smul.addr %s16, 2
          %s157 = smul.addr %s156, 128
          %s158 = scalar_lea.hbm %s0, %s157
          %s159 = sshll.u32 %s152, 4
          %s160 = int_to_ptr.vmem [resolvable:$true] %s159
          %165 = dma.hbm_to_vmem [thread:$0]  %s158, 256, %s160, %s149, 128, 128, 8
        $region28: #{tpu_custom_call.1} parent=23 // pred_fallthru
          _
      $region24: #{tpu_custom_call.1} parent=5 // pred_fallthru
        _
      %p166 = scmp.le.s32.totalorder 1, %s16
      %p167 = scmp.lt.s32.totalorder %s16, 3
      %p168 = pnand %p166, %p167
      %p169 = pneg %p168
      // Predicated region
      $region29: #{tpu_custom_call.1} parent=5 // pred_check
        _
      $region30: #{tpu_custom_call.1} parent=5 // pred_check_branch
        %171 = sbr.rel (%p168) target = $region32
      $region31: #{tpu_custom_call.1} parent=5 // pred_region
        %s172 = ssub.s32 %s16, 1
        %s173 = sand.u32 %s29, 1
        %s174 = scalar_lea.sflag [#allocation4], %s173
        %s175 = sand.u32 %s29, 1
        %s176 = smul.addr %s175, 16
        %s177 = scalar_lea.vmem [#allocation3], %s176
        // Predicated region
        $region33: #{tpu_custom_call.1} parent=31 // pred_check
          %p178 = pneg %p42
        $region34: #{tpu_custom_call.1} parent=31 // pred_check_branch
          %180 = sbr.rel (%p178) target = $region36
        $region35: #{tpu_custom_call.1} parent=31 // pred_region
          %181 = dma.done %s174, 256
        $region36: #{tpu_custom_call.1} parent=31 // pred_fallthru
          _
        // Predicated region
        $region37: #{tpu_custom_call.1} parent=31 // pred_check
          %p182 = pneg %p63
        $region38: #{tpu_custom_call.1} parent=31 // pred_check_branch
          %184 = sbr.rel (%p182) target = $region40
        $region39: #{tpu_custom_call.1} parent=31 // pred_region
          %185 = dma.done [#allocation7], 256
        $region40: #{tpu_custom_call.1} parent=31 // pred_fallthru
          _
        %s186 = sand.u32 %s29, 1
        %s187 = scalar_lea.sflag [#allocation4], %s186
        %s188 = sand.u32 %s29, 1
        %s189 = smul.addr %s188, 16
        %s190 = scalar_lea.vmem [#allocation3], %s189
        %p191 = pneg %p42
        %p192 = pneg %p39
        %p193 = pneg %p63
        %p194 = pneg %p60
        %p195 = pneg %p84
        %p196 = pneg %p81
        %p197 = pneg %p110
        %p198 = pneg %p107
        %s199 = sand.u32 %s97, 1
        %s200 = scalar_lea.sflag [#allocation5], %s199
        %s201 = sand.u32 %s97, 1
        %s202 = smul.addr %s201, 16
        %s203 = scalar_lea.vmem [#allocation8], %s202
        %v204 = vld [vmem:[%s2] sm:$0x1]
        %v206 = vlaneseq
        %v207 = vshrl.u32 %v206, 7
        %v208 = vsub.s32 0, %v207
        %v209 = vrot.slane %v204, %v208
        %211 = vst [vmem:[#allocation2] sm:$0xff] %v209
        %212 = vst [vmem:[#allocation2 + $0x8] sm:$0xff] %v209
        %v213 = vld [vmem:[#allocation6] sm:$0xff]
        %v214 = vld [vmem:[#allocation6 + $0x8] sm:$0x1]
        %v215 = vld [vmem:[%s177] sm:$0xff]
        %v216 = vld [vmem:[%s177 + $0x8] sm:$0x7f]
        %217 = vrot.lane.b32.xlu0 %v215, 8
        %v218 = vpop.permute.xlu0 %217
        %219 = vrot.lane.b32.xlu0 %v216, 8
        %v220 = vpop.permute.xlu0 %219
        %v221 = vlaneseq
        %v222 = vshrl.u32 %v221, 7
        %v223 = vsub.s32 0, %v222
        %v224 = vrot.slane %v213, %v223
        %v225 = vmul.f32 %v218, %v224
        %v226 = vmul.f32 %v220, %v224
        %v227 = vlaneseq
        %v228 = vshrl.u32 %v227, 7
        %v229 = vsub.s32 1, %v228
        %v230 = vrot.slane %v213, %v229
        %v231 = vmul.f32 %v215, %v230
        %v232 = vmul.f32 %v216, %v230
        %v233 = vadd.f32 %v225, %v231
        %v234 = vadd.f32 %v226, %v232
        %235 = vrot.lane.b32.xlu0 %v215, 120
        %v236 = vpop.permute.xlu0 %235
        %237 = vrot.lane.b32.xlu0 %v216, 120
        %v238 = vpop.permute.xlu0 %237
        %v239 = vlaneseq
        %v240 = vshrl.u32 %v239, 7
        %v241 = vsub.s32 2, %v240
        %v242 = vrot.slane %v213, %v241
        %v243 = vmul.f32 %v236, %v242
        %v244 = vmul.f32 %v238, %v242
        %v245 = vadd.f32 %v233, %v243
        %v246 = vadd.f32 %v234, %v244
        %v247 = vld [vmem:[#allocation2 + $0x1] sm:$0xff]
        %v248 = vld [vmem:[#allocation2 + $0x9] sm:$0x7f]
        %v249 = vadd.f32 %v247, %v245
        %v250 = vadd.f32 %v248, %v246
        %251 = vst [vmem:[#allocation2 + $0x1] sm:$0xff] %v249
        %252 = vst [vmem:[#allocation2 + $0x9] sm:$0x7f] %v250
        %v253 = vld [vmem:[%s177] sm:$0xff]
        %v254 = vld [vmem:[%s177 + $0x8] sm:$0xff]
        %255 = vrot.lane.b32.xlu0 %v253, 8
        %v256 = vpop.permute.xlu0 %255
        %257 = vrot.lane.b32.xlu0 %v254, 8
        %v258 = vpop.permute.xlu0 %257
        %v259 = vlaneseq
        %v260 = vshrl.u32 %v259, 7
        %v261 = vsub.s32 3, %v260
        %v262 = vrot.slane %v213, %v261
        %v263 = vmul.f32 %v256, %v262
        %v264 = vmul.f32 %v258, %v262
        %v265 = vlaneseq
        %v266 = vshrl.u32 %v265, 7
        %v267 = vsub.s32 4, %v266
        %v268 = vrot.slane %v213, %v267
        %v269 = vmul.f32 %v253, %v268
        %v270 = vmul.f32 %v254, %v268
        %v271 = vadd.f32 %v263, %v269
        %v272 = vadd.f32 %v264, %v270
        %273 = vrot.lane.b32.xlu0 %v253, 120
        %v274 = vpop.permute.xlu0 %273
        %275 = vrot.lane.b32.xlu0 %v254, 120
        %v276 = vpop.permute.xlu0 %275
        %v277 = vlaneseq
        %v278 = vshrl.u32 %v277, 7
        %v279 = vsub.s32 5, %v278
        %v280 = vrot.slane %v213, %v279
        %v281 = vmul.f32 %v274, %v280
        %v282 = vmul.f32 %v276, %v280
        %v283 = vadd.f32 %v271, %v281
        %v284 = vadd.f32 %v272, %v282
        %v285 = vld [vmem:[#allocation2] sm:$0xff]
        %v286 = vld [vmem:[#allocation2 + $0x8] sm:$0xff]
        %v287 = vadd.f32 %v285, %v283
        %v288 = vadd.f32 %v286, %v284
        %289 = vst [vmem:[#allocation2] sm:$0xff] %v287
        %290 = vst [vmem:[#allocation2 + $0x8] sm:$0xff] %v288
        %v291 = vld [vmem:[%s177 + $0x1] sm:$0xff]
        %v292 = vld [vmem:[%s177 + $0x9] sm:$0x7f]
        %293 = vrot.lane.b32.xlu0 %v291, 8
        %v294 = vpop.permute.xlu0 %293
        %295 = vrot.lane.b32.xlu0 %v292, 8
        %v296 = vpop.permute.xlu0 %295
        %v297 = vlaneseq
        %v298 = vshrl.u32 %v297, 7
        %v299 = vsub.s32 6, %v298
        %v300 = vrot.slane %v213, %v299
        %v301 = vmul.f32 %v294, %v300
        %v302 = vmul.f32 %v296, %v300
        %v303 = vlaneseq
        %v304 = vshrl.u32 %v303, 7
        %v305 = vsub.s32 7, %v304
        %v306 = vrot.slane %v213, %v305
        %v307 = vmul.f32 %v291, %v306
        %v308 = vmul.f32 %v292, %v306
        %v309 = vadd.f32 %v301, %v307
        %v310 = vadd.f32 %v302, %v308
        %311 = vrot.lane.b32.xlu0 %v291, 120
        %v312 = vpop.permute.xlu0 %311
        %313 = vrot.lane.b32.xlu0 %v292, 120
        %v314 = vpop.permute.xlu0 %313
        %v315 = vlaneseq
        %v316 = vshrl.u32 %v315, 7
        %v317 = vsub.s32 0, %v316
        %v318 = vrot.slane %v214, %v317
        %v319 = vmul.f32 %v312, %v318
        %v320 = vmul.f32 %v314, %v318
        %v321 = vadd.f32 %v309, %v319
        %v322 = vadd.f32 %v310, %v320
        %v323 = vld [vmem:[#allocation2] sm:$0xff]
        %v324 = vld [vmem:[#allocation2 + $0x8] sm:$0x7f]
        %v325 = vadd.f32 %v323, %v321
        %v326 = vadd.f32 %v324, %v322
        %327 = vst [vmem:[#allocation2] sm:$0xff] %v325
        %328 = vst [vmem:[#allocation2 + $0x8] sm:$0x7f] %v326
        %v329 = vld [vmem:[#allocation2] sm:$0xff]
        %v330 = vld [vmem:[#allocation2 + $0x8] sm:$0xff]
        %331 = vst [vmem:[%s203] sm:$0xff] %v329
        %332 = vst [vmem:[%s203 + $0x8] sm:$0xff] %v330
        %s333 = sand.u32 %s97, 1
        %s334 = scalar_lea.sflag [#allocation5], %s333
        %s335 = sand.u32 %s97, 1
        %s336 = smul.addr %s335, 16
        %s337 = scalar_lea.vmem [#allocation8], %s336
        // Predicated region
        $region41: #{tpu_custom_call.1} parent=31 // pred_check
          %p338 = pneg %p107
        $region42: #{tpu_custom_call.1} parent=31 // pred_check_branch
          %340 = sbr.rel (%p338) target = $region44
        $region43: #{tpu_custom_call.1} parent=31 // pred_region
          %s342 = ssub.s32 256, 256
          %343 = vsyncadd %s334, %s342
          %s344 = smul.addr %s21, 2
          %s345 = smul.addr %s344, 128
          %s346 = scalar_lea.hbm %s3, %s345
          %s347 = sshll.u32 %s337, 4
          %s348 = int_to_ptr.vmem [resolvable:$true] %s347
          %353 = dma.vmem_to_hbm [thread:$0]  %s348, 256, %s346, %s334, 128, 128, 8
        $region44: #{tpu_custom_call.1} parent=31 // pred_fallthru
          _
      $region32: #{tpu_custom_call.1} parent=5 // pred_fallthru
        _
      %p354 = scmp.le.s32.totalorder 2, %s16
      // Predicated region
      $region45: #{tpu_custom_call.1} parent=5 // pred_check
        %p355 = pneg %p354
      $region46: #{tpu_custom_call.1} parent=5 // pred_check_branch
        %357 = sbr.rel (%p355) target = $region48
      $region47: #{tpu_custom_call.1} parent=5 // pred_region
        %s358 = ssub.s32 %s16, 2
        // Predicated region
        $region49: #{tpu_custom_call.1} parent=47 // pred_check
          %p359 = pneg %p113
        $region50: #{tpu_custom_call.1} parent=47 // pred_check_branch
          %361 = sbr.rel (%p359) target = $region52
        $region51: #{tpu_custom_call.1} parent=47 // pred_region
          %s362 = sand.u32 %s98, 1
          %s363 = scalar_lea.sflag [#allocation5], %s362
          %s364 = sand.u32 %s98, 1
          %s365 = smul.addr %s364, 16
          %s366 = scalar_lea.vmem [#allocation8], %s365
          %367 = dma.done %s363, 256
        $region52: #{tpu_custom_call.1} parent=47 // pred_fallthru
          _
      $region48: #{tpu_custom_call.1} parent=5 // pred_fallthru
        _
    $region6: #{tpu_custom_call.1} parent=1 // loop_footer
      %s20 = sadd.s32 1, %s16
    $region7: #{tpu_custom_call.1} parent=1 // loop_footer_branch
      %15 = sbr.rel target = $region3
    $region8: #{tpu_custom_call.1} parent=1 // loop_exit
      _
    %368 = vsyncpa [#allocation4], 1
    %s369 = scalar_lea.sflag [#allocation4], 1
    %370 = vsyncpa %s369, 1
    %371 = vsyncpa [#allocation7], 1
    %372 = vsyncpa [#allocation5], 1
    %s373 = scalar_lea.sflag [#allocation5], 1
    %374 = vsyncpa %s373, 1

</llo_original>
